<compile_context>
chip_gen: v7x
topology: tpu7x:2x2x1
jax: 0.10.0
libtpu: 0.0.40
codegen_flags: <defaults>
</compile_context>

<pallas_src>
import jax
import jax.numpy as jnp
from jax.experimental import pallas as pl
from jax.experimental.pallas import tpu as pltpu


def daigt_head_kernel(h_ref, m_ref, w_ref, b_ref, out_ref, emb_acc, msk_acc):
    """One (batch-block, seq-block) grid step of the pooled-classifier head.

    h_ref:   [TB, TS, H] last_hidden_state tile (f32 or bf16)
    m_ref:   [TB, TS, 1] attention-mask tile
    w_ref:   [1, H]      classifier weight (PyTorch nn.Linear(H, 1) layout)
    b_ref:   [1, 1]      classifier bias (SMEM)
    out_ref: [TB, 1]     logits tile (written on the last sequence step)
    emb_acc: [TB, H] f32 scratch -- running sum(hidden * mask) over sequence
    msk_acc: [TB, 1] f32 scratch -- running sum(mask) over sequence
    """
    s = pl.program_id(1)

    @pl.when(s == 0)
    def _init():
        emb_acc[...] = jnp.zeros_like(emb_acc)
        msk_acc[...] = jnp.zeros_like(msk_acc)

    # Upcast only the current chunk to f32: live intermediates stay bounded to
    # one [TB, TS, H] chunk plus the [TB, H] accumulator (bf16 inputs OK).
    h = h_ref[...].astype(jnp.float32)          # [TB, TS, H]
    m = m_ref[...].astype(jnp.float32)          # [TB, TS, 1]
    emb_acc[...] += jnp.sum(h * m, axis=1)      # [TB, H]
    msk_acc[...] += jnp.sum(m, axis=1)          # [TB, 1]

    @pl.when(s == pl.num_programs(1) - 1)
    def _finalize():
        # embeddings = sum_embeddings / clamp(sum_mask, min=1e-9)
        inv = pl.reciprocal(jnp.maximum(msk_acc[...], 1e-9))     # exact 1/x
        emb = emb_acc[...] * inv                                  # [TB, H]
        # Linear(H -> 1): degenerate matmul -> VPU multiply + lane reduce.
        w = w_ref[...].astype(jnp.float32)                        # [1, H]
        logits = jnp.sum(emb * w, axis=-1, keepdims=True) + b_ref[0, 0]
        out_ref[...] = logits.astype(out_ref.dtype)


def _round_down(x, m):
    return (x // m) * m


def _choose_tiles(B, S, H, itemsize, per_tile_budget_bytes=2 * 1024 * 1024):
    """Pick (TB, TS) so each hidden-state tile is ~1-2 MiB and layout-legal.

    Constraints:
      * hidden block (TB, TS, H): TS multiple of 8 or TS == S (H is full dim)
      * mask (TB, TS, 1) / out (TB, 1): TB multiple of 8 or TB == B
      * TS must divide S exactly (padded garbage along the reduced axis would
        contaminate the running accumulator); a ragged last batch block is OK.
    """
    # Sequence tile.
    ts = S
    if S % 8 == 0 and 8 * S * H * itemsize > per_tile_budget_bytes:
        cands = [d for d in range(8, S, 8) if S % d == 0]
        fitting = [d for d in cands
                   if 8 * d * H * itemsize <= per_tile_budget_bytes]
        if fitting:
            ts = max(fitting)
        elif cands:
            ts = min(cands)          # best effort: smallest legal seq tile
    # Batch tile.
    if B <= 8:
        tb = B
    else:
        tile_row_bytes = ts * H * itemsize
        max_tb = max(8, _round_down(per_tile_budget_bytes // tile_row_bytes, 8))
        tb = min(max(8, _round_down(B, 8)), max_tb)
        if B >= 16:
            # Keep >= 2 blocks on the parallel batch axis (v7x dual-TC split).
            tb = min(tb, max(8, _round_down((B + 1) // 2, 8)))
    return tb, ts


def daigt_forward(last_hidden_state, attention_mask, w_cls, b_cls,
                  *, block_rows=None, block_seq=None):
    """Masked mean pool over sequence + Linear(H -> 1), as one pallas_call."""
    B, S, H = last_hidden_state.shape
    tb_auto, ts_auto = _choose_tiles(B, S, H, last_hidden_state.dtype.itemsize)
    tb = block_rows if block_rows is not None else tb_auto
    ts = block_seq if block_seq is not None else ts_auto
    assert tb == B or tb % 8 == 0, "block_rows must be a multiple of 8 or == B"
    assert ts == S or (ts % 8 == 0 and S % ts == 0), \
        "block_seq must divide S and be a multiple of 8 (or == S)"

    grid = (pl.cdiv(B, tb), S // ts)
    mask3 = attention_mask.reshape(B, S, 1)   # size-1 lane axis for the mask
    bias2 = b_cls.reshape(1, 1)

    return pl.pallas_call(
        daigt_head_kernel,
        out_shape=jax.ShapeDtypeStruct((B, 1), jnp.float32),
        grid=grid,
        in_specs=[
            # Hidden-state tiles stream over both grid axes (~2 MiB each).
            # (Optional extra knob: pipeline_mode=pl.Buffered(3) here.)
            pl.BlockSpec((tb, ts, H), lambda b, s: (b, s, 0)),
            pl.BlockSpec((tb, ts, 1), lambda b, s: (b, s, 0)),
            pl.BlockSpec((1, H), lambda b, s: (0, 0)),
            pl.BlockSpec(memory_space=pltpu.MemorySpace.SMEM),   # bias scalar
        ],
        out_specs=pl.BlockSpec((tb, 1), lambda b, s: (b, 0)),
        scratch_shapes=[
            pltpu.VMEM((tb, H), jnp.float32),   # sum(hidden * mask) accumulator
            pltpu.VMEM((tb, 1), jnp.float32),   # sum(mask) accumulator
        ],
        compiler_params=pltpu.CompilerParams(
            # Batch blocks are independent (megacore split); sequence axis is
            # a carried reduction.
            dimension_semantics=("parallel", "arbitrary"),
            # Safe on v5e/v6e (128 MiB) and v7x (64 MiB); blocks are small.
            vmem_limit_bytes=32 * 1024 * 1024,
        ),
    )(last_hidden_state, mask3, w_cls, bias2)


def reference_forward(last_hidden_state, attention_mask, w_cls, b_cls):
    """Pure-JAX reference matching the PyTorch forward semantics."""
    m = attention_mask.astype(jnp.float32)[:, :, None]
    sum_emb = jnp.sum(last_hidden_state.astype(jnp.float32) * m, axis=1)
    sum_mask = jnp.maximum(jnp.sum(m, axis=1), 1e-9)
    emb = sum_emb / sum_mask
    return emb @ w_cls.astype(jnp.float32).T + b_cls.reshape(1, 1)


if __name__ == "__main__":
    key = jax.random.PRNGKey(0)
    k_ids, k_emb, k_w, k_h, k_m = jax.random.split(key, 5)

    # --- Test 1: tiny shapes implied by the module's forward (f32) ---
    B, S, H, V = 2, 8, 32, 64
    input_ids = jax.random.randint(k_ids, (B, S), 0, V, dtype=jnp.int32)
    attention_mask = jnp.array(
        [[1, 1, 1, 1, 1, 1, 1, 1],
         [1, 1, 1, 1, 1, 0, 0, 0]], dtype=jnp.float32)

    emb_table = jax.random.normal(k_emb, (V, H), dtype=jnp.float32) * 0.02
    w_cls = jax.random.normal(k_w, (1, H), dtype=jnp.float32) * 0.02  # [1, H]
    b_cls = jnp.zeros((1, 1), dtype=jnp.float32)

    # Stand-in backbone (plain-JAX glue): embedding lookup -> last_hidden_state.
    # TODO(synk): the AutoModel transformer encoder is not reproduced here.
    last_hidden_state = jnp.take(emb_table, input_ids, axis=0)   # [B, S, H]

    logits = daigt_forward(last_hidden_state, attention_mask, w_cls, b_cls)
    logits = jax.block_until_ready(logits)
    ref = reference_forward(last_hidden_state, attention_mask, w_cls, b_cls)
    assert logits.shape == (B, 1)
    assert jnp.allclose(logits, ref, atol=1e-5, rtol=1e-5)

    # --- Test 2: exercises batch + sequence tiling with bf16 hidden states ---
    B2, S2, H2 = 16, 64, 128
    h2 = (jax.random.normal(k_h, (B2, S2, H2), jnp.float32) * 0.02
          ).astype(jnp.bfloat16)
    lens = jax.random.randint(k_m, (B2,), 1, S2 + 1)
    mask2 = (jnp.arange(S2)[None, :] < lens[:, None]).astype(jnp.float32)
    w2 = jax.random.normal(k_w, (1, H2), dtype=jnp.float32) * 0.02
    b2 = jnp.full((1, 1), 0.1, dtype=jnp.float32)

    logits2 = daigt_forward(h2, mask2, w2, b2, block_rows=8, block_seq=16)
    logits2 = jax.block_until_ready(logits2)
    ref2 = reference_forward(h2, mask2, w2, b2)
    assert logits2.shape == (B2, 1)
    assert jnp.allclose(logits2, ref2, atol=1e-4, rtol=1e-4)

    print("KERNEL_OK")
</pallas_src>

<mosaic_0001>
module attributes {stable_mosaic.version = 11 : i64} {
  func.func @daigt_head_kernel(%arg0: i32, %arg1: i32, %arg2: memref<2x8x32xf32, #tpu.memory_space<vmem>>, %arg3: memref<2x8x1xf32, #tpu.memory_space<vmem>>, %arg4: memref<1x32xf32, #tpu.memory_space<vmem>>, %arg5: memref<1x1xf32, #tpu.memory_space<smem>>, %arg6: memref<2x1xf32, #tpu.memory_space<vmem>>, %arg7: memref<2x32xf32, #tpu.memory_space<vmem>>, %arg8: memref<2x1xf32, #tpu.memory_space<vmem>>) attributes {dimension_semantics = [#tpu.dimension_semantics<parallel>, #tpu.dimension_semantics<arbitrary>], iteration_bounds = array<i64: 1, 1>, scalar_prefetch = 0 : i64, scratch_operands = 2 : i64, tpu.core_type = #tpu.core_type<tc>, window_params = [{transform_indices = @transform_0, window_bounds = array<i64: 2, 8, 32>}, {transform_indices = @transform_1, window_bounds = array<i64: 2, 8, 1>}, {pipeline_mode = #tpu.pipeline_mode<synchronous>, transform_indices = @transform_2, window_bounds = array<i64: 1, 32>}, {transform_indices = @transform_3, window_bounds = array<i64: 1, 1>}, {transform_indices = @transform_4, window_bounds = array<i64: 2, 1>}]} {
    %c0_i32 = arith.constant 0 : i32
    %0 = arith.cmpi eq, %arg1, %c0_i32 : i32
    %1 = arith.extui %0 : i1 to i32
    %c0_i32_0 = arith.constant 0 : i32
    %2 = arith.cmpi ne, %1, %c0_i32_0 : i32
    scf.if %2 {
      %cst_17 = arith.constant 0.000000e+00 : f32
      %18 = vector.broadcast %cst_17 : f32 to vector<2x32xf32>
      %c0_18 = arith.constant 0 : index
      %c0_19 = arith.constant 0 : index
      %19 = vector.load %arg7[%c0_18, %c0_19] : memref<2x32xf32, #tpu.memory_space<vmem>>, vector<2x32xf32>
      tpu.vector_store %arg7[%c0_18, %c0_19], %18 {strides = array<i32>} : memref<2x32xf32, #tpu.memory_space<vmem>>, vector<2x32xf32>,
      %cst_20 = arith.constant 0.000000e+00 : f32
      %20 = vector.broadcast %cst_20 : f32 to vector<2x1xf32>
      %c0_21 = arith.constant 0 : index
      %c0_22 = arith.constant 0 : index
      %21 = vector.load %arg8[%c0_21, %c0_22] : memref<2x1xf32, #tpu.memory_space<vmem>>, vector<2x1xf32>
      tpu.vector_store %arg8[%c0_21, %c0_22], %20 {strides = array<i32>} : memref<2x1xf32, #tpu.memory_space<vmem>>, vector<2x1xf32>,
    } else {
    }
    %c0 = arith.constant 0 : index
    %c0_1 = arith.constant 0 : index
    %c0_2 = arith.constant 0 : index
    %3 = vector.load %arg2[%c0, %c0_1, %c0_2] : memref<2x8x32xf32, #tpu.memory_space<vmem>>, vector<2x8x32xf32>
    %c0_3 = arith.constant 0 : index
    %c0_4 = arith.constant 0 : index
    %c0_5 = arith.constant 0 : index
    %4 = vector.load %arg3[%c0_3, %c0_4, %c0_5] : memref<2x8x1xf32, #tpu.memory_space<vmem>>, vector<2x8x1xf32>
    %c0_6 = arith.constant 0 : index
    %c0_7 = arith.constant 0 : index
    %5 = vector.load %arg7[%c0_6, %c0_7] : memref<2x32xf32, #tpu.memory_space<vmem>>, vector<2x32xf32>
    %6 = vector.broadcast %4 : vector<2x8x1xf32> to vector<2x8x32xf32>
    %7 = arith.mulf %3, %6 : vector<2x8x32xf32>
    %cst = arith.constant dense<0.000000e+00> : vector<2x32xf32>
    %8 = vector.multi_reduction <add>, %7, %cst [1] : vector<2x8x32xf32> to vector<2x32xf32>
    %9 = arith.addf %5, %8 : vector<2x32xf32>
    %c0_8 = arith.constant 0 : index
    %c0_9 = arith.constant 0 : index
    %10 = vector.load %arg7[%c0_8, %c0_9] : memref<2x32xf32, #tpu.memory_space<vmem>>, vector<2x32xf32>
    tpu.vector_store %arg7[%c0_8, %c0_9], %9 {strides = array<i32>} : memref<2x32xf32, #tpu.memory_space<vmem>>, vector<2x32xf32>,
    %c0_10 = arith.constant 0 : index
    %c0_11 = arith.constant 0 : index
    %11 = vector.load %arg8[%c0_10, %c0_11] : memref<2x1xf32, #tpu.memory_space<vmem>>, vector<2x1xf32>
    %cst_12 = arith.constant dense<0.000000e+00> : vector<2x1xf32>
    %12 = vector.multi_reduction <add>, %4, %cst_12 [1] : vector<2x8x1xf32> to vector<2x1xf32>
    %13 = arith.addf %11, %12 : vector<2x1xf32>
    %c0_13 = arith.constant 0 : index
    %c0_14 = arith.constant 0 : index
    %14 = vector.load %arg8[%c0_13, %c0_14] : memref<2x1xf32, #tpu.memory_space<vmem>>, vector<2x1xf32>
    tpu.vector_store %arg8[%c0_13, %c0_14], %13 {strides = array<i32>} : memref<2x1xf32, #tpu.memory_space<vmem>>, vector<2x1xf32>,
    %c0_i32_15 = arith.constant 0 : i32
    %15 = arith.cmpi eq, %arg1, %c0_i32_15 : i32
    %16 = arith.extui %15 : i1 to i32
    %c0_i32_16 = arith.constant 0 : i32
    %17 = arith.cmpi ne, %16, %c0_i32_16 : i32
    scf.if %17 {
      %c0_17 = arith.constant 0 : index
      %c0_18 = arith.constant 0 : index
      %18 = vector.load %arg8[%c0_17, %c0_18] : memref<2x1xf32, #tpu.memory_space<vmem>>, vector<2x1xf32>
      %cst_19 = arith.constant 9.99999971E-10 : f32
      %19 = vector.broadcast %cst_19 : f32 to vector<2x1xf32>
      %20 = arith.maximumf %18, %19 : vector<2x1xf32>
      %21 = tpu.reciprocal %20 : vector<2x1xf32> -> vector<2x1xf32>
      %c0_20 = arith.constant 0 : index
      %c0_21 = arith.constant 0 : index
      %22 = vector.load %arg7[%c0_20, %c0_21] : memref<2x32xf32, #tpu.memory_space<vmem>>, vector<2x32xf32>
      %23 = vector.broadcast %21 : vector<2x1xf32> to vector<2x32xf32>
      %24 = arith.mulf %22, %23 : vector<2x32xf32>
      %c0_22 = arith.constant 0 : index
      %c0_23 = arith.constant 0 : index
      %25 = vector.load %arg4[%c0_22, %c0_23] : memref<1x32xf32, #tpu.memory_space<vmem>>, vector<1x32xf32>
      %26 = vector.broadcast %25 : vector<1x32xf32> to vector<2x32xf32>
      %27 = arith.mulf %24, %26 : vector<2x32xf32>
      %cst_24 = arith.constant dense<0.000000e+00> : vector<2xf32>
      %28 = vector.multi_reduction <add>, %27, %cst_24 [1] : vector<2x32xf32> to vector<2xf32>
      %29 = vector.shape_cast %28 : vector<2xf32> to vector<2x1xf32>
      %c0_25 = arith.constant 0 : index
      %c0_26 = arith.constant 0 : index
      %30 = memref.load %arg5[%c0_25, %c0_26] : memref<1x1xf32, #tpu.memory_space<smem>>
      %31 = vector.broadcast %30 : f32 to vector<2x1xf32>
      %32 = arith.addf %29, %31 : vector<2x1xf32>
      %c0_27 = arith.constant 0 : index
      %c0_28 = arith.constant 0 : index
      %33 = vector.load %arg6[%c0_27, %c0_28] : memref<2x1xf32, #tpu.memory_space<vmem>>, vector<2x1xf32>
      tpu.vector_store %arg6[%c0_27, %c0_28], %32 {strides = array<i32>} : memref<2x1xf32, #tpu.memory_space<vmem>>, vector<2x1xf32>,
    } else {
    }
    return
  }
  func.func @transform_0(%arg0: i32, %arg1: i32) -> (i32, i32, i32) {
    %c0_i32 = arith.constant 0 : i32
    %c0_i32_0 = arith.constant 0 : i32
    return %arg0, %arg1, %c0_i32 : i32, i32, i32
  }
  func.func @transform_1(%arg0: i32, %arg1: i32) -> (i32, i32, i32) {
    %c0_i32 = arith.constant 0 : i32
    %c0_i32_0 = arith.constant 0 : i32
    return %arg0, %arg1, %c0_i32 : i32, i32, i32
  }
  func.func @transform_2(%arg0: i32, %arg1: i32) -> (i32, i32) {
    %c0_i32 = arith.constant 0 : i32
    %c0_i32_0 = arith.constant 0 : i32
    %c0_i32_1 = arith.constant 0 : i32
    return %c0_i32, %c0_i32_0 : i32, i32
  }
  func.func @transform_3(%arg0: i32, %arg1: i32) -> (i32, i32) {
    %c0_i32 = arith.constant 0 : i32
    %c0_i32_0 = arith.constant 0 : i32
    %c0_i32_1 = arith.constant 0 : i32
    return %c0_i32, %c0_i32_0 : i32, i32
  }
  func.func @transform_4(%arg0: i32, %arg1: i32) -> (i32, i32) {
    %c0_i32 = arith.constant 0 : i32
    %c0_i32_0 = arith.constant 0 : i32
    return %arg0, %c0_i32 : i32, i32
  }
}

</mosaic_0001>

<llo_original>
// kernel: tpu_custom_call.1
$region0: #{tpu_custom_call.1}
  #allocation0 [shape = 'u32[]', space=smem, size = 0x4, offset = 0x4, fixed_abs, tag = 'smem constant byte address 0x4 - core index']
  #allocation1 [shape = 'u32[144,128]{1,0:T(1,128)}', space=vmem, size = 0x12000, scoped, tag = 'internal scratch']
  #allocation2 [shape = 'f32[2,32]{1,0:T(2,128)}', space=vmem, size = 0x400, scoped, tag = 'scratch operand']
  #allocation3 [shape = 'f32[2,1]{1,0:T(2,128)}', space=vmem, size = 0x400, scoped, tag = 'scratch operand']
  #allocation4 [shape = 'f32[1,1]{1,0:T(1,128)S(6)}', space=smem, size = 0x200, scoped, tag = 'scoped memory for tpu_custom_call.1']
  %s0 = inlined_call_operand.vmem [shape: f32[2,8,32], index: 0, kind: input, shape index: {}]
  %s1 = inlined_call_operand.vmem [shape: f32[2,8,1], index: 1, kind: input, shape index: {}]
  %s2 = inlined_call_operand.vmem [shape: f32[1,32], index: 2, kind: input, shape index: {}]
  %s3 = inlined_call_operand.<no memory space> [shape: f32[1,1], index: 3, kind: input, shape index: {}]
  %s4 = inlined_call_operand.vmem [shape: f32[2,1], index: 4, kind: output, shape index: {}]
  %s5 = sld [smem:[#allocation0]]
  $region34: #{tpu_custom_call.1} parent=0
    _
  %s7 = ssub.s32 1, %s5
  %s8 = scalar_select 0, %s7, %s5
  %9 = sst [smem:[#allocation4]] %s3
  // Predicated region
  $region2: #{tpu_custom_call.1} parent=0 // pred_check
    _
  $region3: #{tpu_custom_call.1} parent=0 // pred_check_branch
    %11 = sbr.rel (0) target = $region5
  $region4: #{tpu_custom_call.1} parent=0 // pred_region
    _
  $region5: #{tpu_custom_call.1} parent=0 // pred_fallthru
    _
  // Predicated region
  $region6: #{tpu_custom_call.1} parent=0 // pred_check
    _
  $region7: #{tpu_custom_call.1} parent=0 // pred_check_branch
    %13 = sbr.rel (0) target = $region9
  $region8: #{tpu_custom_call.1} parent=0 // pred_region
    _
  $region9: #{tpu_custom_call.1} parent=0 // pred_fallthru
    _
  // Predicated region
  $region10: #{tpu_custom_call.1} parent=0 // pred_check
    _
  $region11: #{tpu_custom_call.1} parent=0 // pred_check_branch
    %15 = sbr.rel (0) target = $region13
  $region12: #{tpu_custom_call.1} parent=0 // pred_region
    _
  $region13: #{tpu_custom_call.1} parent=0 // pred_fallthru
    _
  // Predicated region
  $region14: #{tpu_custom_call.1} parent=0 // pred_check
    _
  $region15: #{tpu_custom_call.1} parent=0 // pred_check_branch
    %17 = sbr.rel (0) target = $region17
  $region16: #{tpu_custom_call.1} parent=0 // pred_region
    _
  $region17: #{tpu_custom_call.1} parent=0 // pred_fallthru
    _
  %p18 = scmp.eq.s32.totalorder 0, 0
  // Predicated region
  $region18: #{tpu_custom_call.1} parent=0 // pred_check
    %p19 = pneg %p18
  $region19: #{tpu_custom_call.1} parent=0 // pred_check_branch
    %21 = sbr.rel (%p19) target = $region21
  $region20: #{tpu_custom_call.1} parent=0 // pred_region
    %vm22 = vcmask 254976
    %23 = vst.msk [vmem:[#allocation2] sm:$0x3] %vm22, 0.0
    %vm24 = vcmask 1024
    %25 = vst.msk [vmem:[#allocation3] sm:$0x3] %vm24, 0.0
  $region21: #{tpu_custom_call.1} parent=0 // pred_fallthru
    _
  %v26 = vld [vmem:[%s0] sm:$0xff]
  %v27 = vld [vmem:[%s0 + $0x8] sm:$0xff]
  %v28 = vld [vmem:[%s1] sm:$0xff]
  %v29 = vld [vmem:[%s1 + $0x8] sm:$0xff]
  %v30 = vld [vmem:[#allocation2] sm:$0x3]
  %32 = vset.pattern.permute.xlu0 0
  %33 = vperm.xlu0 %32, %v28
  %v34 = vpop.permute.xlu0 %33
  %37 = vset.pattern.permute.xlu0 0
  %38 = vperm.xlu0 %37, %v29
  %v39 = vpop.permute.xlu0 %38
  %v41 = vmul.f32 %v26, %v34
  %v42 = vmul.f32 %v27, %v39
  %vm43 = vcmask 261120
  %v44 = vsel %vm43, %v41, 0.0
  %v45 = vrot.slane %v44, 4
  %v46 = vadd.f32 %v44, %v45
  %v47 = vrot.slane %v46, 2
  %v48 = vadd.f32 %v46, %v47
  %v49 = vrot.slane %v48, 1
  %v50 = vadd.f32 %v48, %v49
  %v51 = vsel %vm43, %v42, 0.0
  %v52 = vrot.slane %v51, 4
  %v53 = vadd.f32 %v51, %v52
  %v54 = vrot.slane %v53, 2
  %v55 = vadd.f32 %v53, %v54
  %v56 = vrot.slane %v55, 1
  %v57 = vadd.f32 %v55, %v56
  %vm60 = vcmask 1041409
  %v61 = vsel %vm60, %v57, %v50
  %v63 = vadd.f32 %v30, %v61
  %vm64 = vcmask 254976
  %65 = vst.msk [vmem:[#allocation2] sm:$0x3] %vm64, %v63
  %v66 = vld [vmem:[#allocation3] sm:$0x3]
  %vm67 = vcmask 7168
  %v68 = vsel %vm67, %v28, 0.0
  %v69 = vrot.slane %v68, 4
  %v70 = vadd.f32 %v68, %v69
  %v71 = vrot.slane %v70, 2
  %v72 = vadd.f32 %v70, %v71
  %v73 = vrot.slane %v72, 1
  %v74 = vadd.f32 %v72, %v73
  %v75 = vsel %vm67, %v29, 0.0
  %v76 = vrot.slane %v75, 4
  %v77 = vadd.f32 %v75, %v76
  %v78 = vrot.slane %v77, 2
  %v79 = vadd.f32 %v77, %v78
  %v80 = vrot.slane %v79, 1
  %v81 = vadd.f32 %v79, %v80
  %v84 = vsel %vm60, %v81, %v74
  %v86 = vadd.f32 %v66, %v84
  %vm87 = vcmask 1024
  %88 = vst.msk [vmem:[#allocation3] sm:$0x3] %vm87, %v86
  // Predicated region
  $region22: #{tpu_custom_call.1} parent=0 // pred_check
    %p89 = pneg %p18
  $region23: #{tpu_custom_call.1} parent=0 // pred_check_branch
    %91 = sbr.rel (%p89) target = $region25
  $region24: #{tpu_custom_call.1} parent=0 // pred_region
    %v92 = vld [vmem:[#allocation3] sm:$0x3]
    %v93 = vmax.f32 %v92, 1e-09
    %v94 = vrcp.pop %v93
    %v95 = vld [vmem:[#allocation2] sm:$0x3]
    %97 = vset.pattern.permute.xlu0 0
    %98 = vperm.xlu0 %97, %v94
    %v99 = vpop.permute.xlu0 %98
    %v101 = vmul.f32 %v95, %v99
    %v102 = vld [vmem:[%s2] sm:$0x1]
    %v104 = vlaneseq
    %v105 = vshrl.u32 %v104, 7
    %v106 = vsub.s32 0, %v105
    %v107 = vrot.slane %v102, %v106
    %v109 = vmul.f32 %v101, %v107
    %v110 = vsel %vm64, %v109, 0.0
    %111 = vadd.xlane.f32.xlu0 %v110
    %v112 = vpop.xlane.xlu0 %111
    %s113 = sld [smem:[#allocation4]]
    %v114 = vstv %s113
    %v115 = vadd.f32 %v112, %v114
    %116 = vst.msk [vmem:[%s4] sm:$0x3] %vm87, %v115
  $region25: #{tpu_custom_call.1} parent=0 // pred_fallthru
    _
  // Predicated region
  $region26: #{tpu_custom_call.1} parent=0 // pred_check
    _
  $region27: #{tpu_custom_call.1} parent=0 // pred_check_branch
    %118 = sbr.rel (0) target = $region29
  $region28: #{tpu_custom_call.1} parent=0 // pred_region
    _
  $region29: #{tpu_custom_call.1} parent=0 // pred_fallthru
    _
  // Predicated region
  $region30: #{tpu_custom_call.1} parent=0 // pred_check
    _
  $region31: #{tpu_custom_call.1} parent=0 // pred_check_branch
    %120 = sbr.rel (0) target = $region33
  $region32: #{tpu_custom_call.1} parent=0 // pred_region
    _
  $region33: #{tpu_custom_call.1} parent=0 // pred_fallthru
    _

</llo_original>
